<compile_context>
chip_gen: v7x
topology: tpu7x:2x2x1
jax: 0.10.0
libtpu: 0.0.40
codegen_flags: <defaults>
</compile_context>

<pallas_src>
import math

import jax
import jax.numpy as jnp
from jax import lax
from jax.experimental import pallas as pl
from jax.experimental.pallas import tpu as pltpu


# -----------------------------------------------------------------------------
# Per-generation VMEM budget (v5e/v6e: 128 MiB physical, v7x: 64 MiB per TC).
# -----------------------------------------------------------------------------
_VMEM_CAP_CACHE = None


def _vmem_cap_bytes():
    global _VMEM_CAP_CACHE
    if _VMEM_CAP_CACHE is None:
        try:
            info = pltpu.get_tpu_info()
            cap = int(getattr(info, "vmem_capacity_bytes", 0))
            _VMEM_CAP_CACHE = cap if cap > 0 else (64 << 20)
        except Exception:
            _VMEM_CAP_CACHE = 64 << 20  # conservative (v7x-sized) fallback
    return _VMEM_CAP_CACHE


def _vmem_limit_bytes():
    # ~3/4 of physical, capped at ~96 MiB: 96 MiB on v5e/v6e, 48 MiB on v7x.
    return min((_vmem_cap_bytes() * 3) // 4, 96 * 1024 * 1024)


def _pick_tile(dim, target):
    """Largest tile <= target that divides dim (full dim if dim <= target)."""
    if dim <= target:
        return dim
    cand = target
    while cand >= 128:
        if dim % cand == 0:
            return cand
        cand //= 2
    return dim  # always a legal (full-extent) block


# -----------------------------------------------------------------------------
# Tiled linear:  y = x @ W_t + b   (W_t is the pre-transposed (in, out) weight,
# already bf16; activations are cast to bf16 in-kernel; accumulation in f32).
# -----------------------------------------------------------------------------
def _linear_kernel_single_k(x_ref, w_ref, b_ref, o_ref):
    acc = lax.dot_general(
        x_ref[...].astype(jnp.bfloat16), w_ref[...],
        (((1,), (0,)), ((), ())), preferred_element_type=jnp.float32)
    o_ref[...] = (acc + b_ref[...]).astype(o_ref.dtype)


def _linear_kernel_acc(x_ref, w_ref, b_ref, o_ref, acc_ref):
    k_idx = pl.program_id(2)

    @pl.when(k_idx == 0)
    def _():
        acc_ref[...] = jnp.zeros_like(acc_ref)

    acc_ref[...] += lax.dot_general(
        x_ref[...].astype(jnp.bfloat16), w_ref[...],
        (((1,), (0,)), ((), ())), preferred_element_type=jnp.float32)

    @pl.when(k_idx == pl.num_programs(2) - 1)
    def _():
        o_ref[...] = (acc_ref[...] + b_ref[...]).astype(o_ref.dtype)


def pallas_linear(x2d, w_t, b_row, out_dtype=jnp.float32):
    """x2d: (M, K) f32/bf16, w_t: (K, N) bf16, b_row: (1, N) f32 -> (M, N)."""
    m, kdim = x2d.shape
    n = w_t.shape[1]
    tm = _pick_tile(m, 512)
    tn = _pick_tile(n, 512)
    tk = kdim if kdim <= 2048 else _pick_tile(kdim, 1024)

    if tk == kdim:
        # Single K step: no accumulator scratch, no K grid axis, bias fused.
        return pl.pallas_call(
            _linear_kernel_single_k,
            out_shape=jax.ShapeDtypeStruct((m, n), out_dtype),
            grid_spec=pltpu.PrefetchScalarGridSpec(
                num_scalar_prefetch=0,
                grid=(m // tm, n // tn),
                in_specs=[
                    pl.BlockSpec((tm, kdim), lambda i, j: (i, 0)),
                    pl.BlockSpec((kdim, tn), lambda i, j: (0, j)),
                    pl.BlockSpec((1, tn), lambda i, j: (0, j)),
                ],
                out_specs=pl.BlockSpec((tm, tn), lambda i, j: (i, j)),
            ),
            compiler_params=pltpu.CompilerParams(
                dimension_semantics=("parallel", "parallel"),
                vmem_limit_bytes=_vmem_limit_bytes()),
        )(x2d, w_t, b_row)

    return pl.pallas_call(
        _linear_kernel_acc,
        out_shape=jax.ShapeDtypeStruct((m, n), out_dtype),
        grid_spec=pltpu.PrefetchScalarGridSpec(
            num_scalar_prefetch=0,
            grid=(m // tm, n // tn, kdim // tk),
            in_specs=[
                pl.BlockSpec((tm, tk), lambda i, j, k: (i, k)),
                pl.BlockSpec((tk, tn), lambda i, j, k: (k, j)),
                pl.BlockSpec((1, tn), lambda i, j, k: (0, j)),
            ],
            out_specs=pl.BlockSpec((tm, tn), lambda i, j, k: (i, j)),
            scratch_shapes=[pltpu.VMEM((tm, tn), jnp.float32)],
        ),
        compiler_params=pltpu.CompilerParams(
            dimension_semantics=("parallel", "parallel", "arbitrary"),
            vmem_limit_bytes=_vmem_limit_bytes()),
    )(x2d, w_t, b_row)


# -----------------------------------------------------------------------------
# Flash-style multi-head attention, lane-dense (B, S, H*depth) layout.
# The 1/sqrt(depth) scale is pre-folded into the q projection weights.
# -----------------------------------------------------------------------------
def _attn_kernel_headgrid(q_ref, k_ref, v_ref, o_ref, m_sc, l_sc, acc_sc):
    """Grid = (B, H, Sq-tiles, Sk-tiles); heads are a grid axis (depth%128==0)."""
    ki = pl.program_id(3)

    @pl.when(ki == 0)
    def _():
        m_sc[...] = jnp.full_like(m_sc, -jnp.inf)
        l_sc[...] = jnp.zeros_like(l_sc)
        acc_sc[...] = jnp.zeros_like(acc_sc)

    qh = q_ref[0]                                      # (tq, depth) bf16
    kh = k_ref[0]                                      # (tkv, depth) bf16
    vh = v_ref[0]                                      # (tkv, depth) bf16

    s = lax.dot_general(qh, kh, (((1,), (1,)), ((), ())),
                        preferred_element_type=jnp.float32)   # (tq, tkv)
    m_prev = m_sc[...]
    m_new = jnp.maximum(m_prev, jnp.max(s, axis=-1, keepdims=True))
    alpha = jnp.exp(m_prev - m_new)
    p = jnp.exp(s - m_new)
    l_sc[...] = alpha * l_sc[...] + jnp.sum(p, axis=-1, keepdims=True)
    acc_sc[...] = alpha * acc_sc[...] + lax.dot_general(
        p.astype(vh.dtype), vh, (((1,), (0,)), ((), ())),
        preferred_element_type=jnp.float32)
    m_sc[...] = m_new

    @pl.when(ki == pl.num_programs(3) - 1)
    def _():
        inv_l = pl.reciprocal(l_sc[...], approx=True)          # EUP slot
        o_ref[0] = (acc_sc[...] * inv_l).astype(o_ref.dtype)


def _make_attn_kernel_headloop(num_heads, depth):
    """Fallback when depth is not lane-aligned: heads sliced in-kernel."""

    def attn_kernel(q_ref, k_ref, v_ref, o_ref, m_sc, l_sc, acc_sc):
        ki = pl.program_id(2)

        @pl.when(ki == 0)
        def _():
            m_sc[...] = jnp.full_like(m_sc, -jnp.inf)
            l_sc[...] = jnp.zeros_like(l_sc)
            acc_sc[...] = jnp.zeros_like(acc_sc)

        # TODO(synk): for large num_heads use the grid-over-heads path (needs
        # depth % 128 == 0); static unrolling is only appropriate for few heads.
        for h in range(num_heads):
            sl = slice(h * depth, (h + 1) * depth)
            qh = q_ref[0, :, sl]                     # (tq, depth) bf16 (pre-scaled)
            kh = k_ref[0, :, sl]                     # (tkv, depth) bf16
            vh = v_ref[0, :, sl]                     # (tkv, depth) bf16

            s = lax.dot_general(qh, kh, (((1,), (1,)), ((), ())),
                                preferred_element_type=jnp.float32)  # (tq, tkv)
            m_prev = m_sc[h]
            m_new = jnp.maximum(m_prev, jnp.max(s, axis=-1, keepdims=True))
            alpha = jnp.exp(m_prev - m_new)
            p = jnp.exp(s - m_new)
            l_sc[h] = alpha * l_sc[h] + jnp.sum(p, axis=-1, keepdims=True)
            acc_sc[:, sl] = alpha * acc_sc[:, sl] + lax.dot_general(
                p.astype(vh.dtype), vh, (((1,), (0,)), ((), ())),
                preferred_element_type=jnp.float32)
            m_sc[h] = m_new

        @pl.when(ki == pl.num_programs(2) - 1)
        def _():
            # Normalize per head inside the f32 scratch, then ONE lane-dense
            # store of the full (tq, H*depth) tile (avoids masked vst per head).
            for h in range(num_heads):
                sl = slice(h * depth, (h + 1) * depth)
                inv_l = pl.reciprocal(l_sc[h], approx=True)
                acc_sc[:, sl] = acc_sc[:, sl] * inv_l
            o_ref[0] = acc_sc[...].astype(o_ref.dtype)

    return attn_kernel


def pallas_mha(q, k, v, num_heads, depth):
    """q: (B, Sq, H*depth) bf16, k/v: (B, Sk, H*depth) bf16 -> (B, Sq, H*depth) bf16."""
    B, Sq, D = q.shape
    Sk = k.shape[1]
    # Larger kv/q tiles on 128-MiB VMEM parts (v5e/v6e); tighter on v7x (64 MiB).
    target = 512 if _vmem_cap_bytes() >= (96 << 20) else 256
    tq = _pick_tile(Sq, target)
    tkv = _pick_tile(Sk, target)
    vmem_limit = _vmem_limit_bytes()

    if depth % 128 == 0:
        # Heads on the grid: no unrolled head loop, per-head K/V slices are
        # pipelined by BlockSpec, scratch shrinks to (tq, depth).
        return pl.pallas_call(
            _attn_kernel_headgrid,
            out_shape=jax.ShapeDtypeStruct((B, Sq, D), jnp.bfloat16),
            grid_spec=pltpu.PrefetchScalarGridSpec(
                num_scalar_prefetch=0,
                grid=(B, num_heads, Sq // tq, Sk // tkv),
                in_specs=[
                    pl.BlockSpec((1, tq, depth), lambda b, h, qi, ki: (b, qi, h)),
                    pl.BlockSpec((1, tkv, depth), lambda b, h, qi, ki: (b, ki, h)),
                    pl.BlockSpec((1, tkv, depth), lambda b, h, qi, ki: (b, ki, h)),
                ],
                out_specs=pl.BlockSpec((1, tq, depth),
                                       lambda b, h, qi, ki: (b, qi, h)),
                scratch_shapes=[
                    pltpu.VMEM((tq, 1), jnp.float32),       # running max
                    pltpu.VMEM((tq, 1), jnp.float32),       # running sum
                    pltpu.VMEM((tq, depth), jnp.float32),   # output accumulator
                ],
            ),
            compiler_params=pltpu.CompilerParams(
                dimension_semantics=("parallel", "parallel", "parallel",
                                     "arbitrary"),
                vmem_limit_bytes=vmem_limit),
        )(q, k, v)

    # Fallback: heads sliced in-kernel (depth not a multiple of 128).
    # NOTE: m/l scratch (H, tq, 1) lane-pads to 128; negligible for small H but
    # must be counted in the v7x budget for large H.
    return pl.pallas_call(
        _make_attn_kernel_headloop(num_heads, depth),
        out_shape=jax.ShapeDtypeStruct((B, Sq, D), jnp.bfloat16),
        grid_spec=pltpu.PrefetchScalarGridSpec(
            num_scalar_prefetch=0,
            grid=(B, Sq // tq, Sk // tkv),
            in_specs=[
                pl.BlockSpec((1, tq, D), lambda b, qi, ki: (b, qi, 0)),
                pl.BlockSpec((1, tkv, D), lambda b, qi, ki: (b, ki, 0)),
                pl.BlockSpec((1, tkv, D), lambda b, qi, ki: (b, ki, 0)),
            ],
            out_specs=pl.BlockSpec((1, tq, D), lambda b, qi, ki: (b, qi, 0)),
            scratch_shapes=[
                pltpu.VMEM((num_heads, tq, 1), jnp.float32),  # running max
                pltpu.VMEM((num_heads, tq, 1), jnp.float32),  # running sum
                pltpu.VMEM((tq, D), jnp.float32),             # lane-dense acc
            ],
        ),
        compiler_params=pltpu.CompilerParams(
            dimension_semantics=("parallel", "parallel", "arbitrary"),
            vmem_limit_bytes=vmem_limit),
    )(q, k, v)


# -----------------------------------------------------------------------------
# BaseAttention-equivalent module (parameters initialized deterministically).
# -----------------------------------------------------------------------------
class BaseAttentionPallas:
    def __init__(self, query_dim, key_dim, value_dim, num_heads=1, key=None):
        assert query_dim % num_heads == 0
        self.query_dim = query_dim
        self.key_dim = key_dim
        self.value_dim = value_dim
        self.num_heads = num_heads
        self.depth = query_dim // num_heads

        key = jax.random.PRNGKey(0) if key is None else key
        ks = jax.random.split(key, 8)

        def init_linear(kw, kb, out_dim, in_dim):
            # deterministic small-scale init (synthetic weights, not a checkpoint)
            w = 0.02 * jax.random.normal(kw, (out_dim, in_dim), jnp.float32)
            b = 0.01 * jax.random.normal(kb, (out_dim,), jnp.float32)
            return w, b

        # f32 originals (parity with nn.Linear; used by the pure-JAX reference).
        self.wq_w, self.wq_b = init_linear(ks[0], ks[1], query_dim, query_dim)
        self.wk_w, self.wk_b = init_linear(ks[2], ks[3], key_dim, key_dim)
        self.wv_w, self.wv_b = init_linear(ks[4], ks[5], value_dim, value_dim)
        self.dense_w, self.dense_b = init_linear(ks[6], ks[7], value_dim, value_dim)

        # Kernel-side prepared weights: pre-transposed to (in, out), bf16, with
        # the 1/sqrt(depth) attention scale folded into wq/bq (free at init).
        scale = 1.0 / math.sqrt(self.depth)
        self._wq_t = (self.wq_w * scale).T.astype(jnp.bfloat16)
        self._bq = (self.wq_b * scale).reshape(1, -1).astype(jnp.float32)
        self._wk_t = self.wk_w.T.astype(jnp.bfloat16)
        self._bk = self.wk_b.reshape(1, -1).astype(jnp.float32)
        self._wv_t = self.wv_w.T.astype(jnp.bfloat16)
        self._bv = self.wv_b.reshape(1, -1).astype(jnp.float32)
        self._wd_t = self.dense_w.T.astype(jnp.bfloat16)
        self._bd = self.dense_b.reshape(1, -1).astype(jnp.float32)

        # Fused qkv weight for the self-attention fast path.
        if query_dim == key_dim == value_dim:
            self._wqkv_t = jnp.concatenate(
                [self._wq_t, self._wk_t, self._wv_t], axis=1)
            self._bqkv = jnp.concatenate([self._bq, self._bk, self._bv], axis=1)
        else:
            self._wqkv_t = None
            self._bqkv = None

    # Kept for parity with the PyTorch module / used by the pure-JAX reference;
    # the Pallas path keeps the lane-dense (B, S, H*depth) layout throughout.
    def split_heads(self, x, batch_size):
        x = x.reshape(batch_size, -1, self.num_heads, self.depth)
        return jnp.transpose(x, (0, 2, 1, 3))

    def combine_heads(self, x, batch_size):
        x = jnp.transpose(x, (0, 2, 1, 3))
        return x.reshape(batch_size, -1, self.num_heads * self.depth)

    def __call__(self, query, key, value, mask=None):
        # TODO(synk): mask is accepted but not applied (mask=None path only);
        # BaseAttention.forward itself raises NotImplementedError in PyTorch.
        B, Sq, _ = query.shape
        Sk = key.shape[1]

        if (query is key) and (key is value) and self._wqkv_t is not None:
            # Self-attention fast path: one GEMM with 3x N; input read once.
            d = self.query_dim
            qkv = pallas_linear(query.reshape(B * Sq, d),
                                self._wqkv_t, self._bqkv, out_dtype=jnp.bfloat16)
            # TODO(synk): when depth % 128 == 0 the packed qkv could feed the
            # attention kernel directly via column-block index maps (no slices).
            q, k, v = qkv[:, :d], qkv[:, d:2 * d], qkv[:, 2 * d:]
        else:
            q = pallas_linear(query.reshape(B * Sq, self.query_dim),
                              self._wq_t, self._bq, out_dtype=jnp.bfloat16)
            k = pallas_linear(key.reshape(B * Sk, self.key_dim),
                              self._wk_t, self._bk, out_dtype=jnp.bfloat16)
            v = pallas_linear(value.reshape(B * Sk, self.value_dim),
                              self._wv_t, self._bv, out_dtype=jnp.bfloat16)

        q = q.reshape(B, Sq, self.query_dim)   # lane-dense (B, S, H*depth)
        k = k.reshape(B, Sk, self.key_dim)
        v = v.reshape(B, Sk, self.value_dim)

        attn = pallas_mha(q, k, v, self.num_heads, self.depth)

        out = pallas_linear(attn.reshape(B * Sq, self.value_dim),
                            self._wd_t, self._bd, out_dtype=jnp.float32)
        return out.reshape(B, Sq, self.value_dim)


# -----------------------------------------------------------------------------
# Pure-JAX reference (canonical math: unscaled wq, 1/sqrt(depth) on scores,
# bf16 matmul inputs with f32 accumulation).
# -----------------------------------------------------------------------------
def reference_forward(mod, query, key, value):
    bf16 = jnp.bfloat16

    def lin(x, w, b, out_dtype):
        y = jnp.dot(x.astype(bf16), w.astype(bf16).T,
                    preferred_element_type=jnp.float32) + b
        return y.astype(out_dtype)

    B, _, _ = query.shape
    q = mod.split_heads(lin(query, mod.wq_w, mod.wq_b, bf16), B)
    k = mod.split_heads(lin(key, mod.wk_w, mod.wk_b, bf16), B)
    v = mod.split_heads(lin(value, mod.wv_w, mod.wv_b, bf16), B)

    s = jnp.einsum('bhqd,bhkd->bhqk', q, k,
                   preferred_element_type=jnp.float32) / math.sqrt(mod.depth)
    p = jax.nn.softmax(s, axis=-1)
    o = jnp.einsum('bhqk,bhkd->bhqd', p.astype(bf16), v,
                   preferred_element_type=jnp.float32)
    concat = mod.combine_heads(o, B).astype(bf16)
    return lin(concat, mod.dense_w, mod.dense_b, jnp.float32)


def _check(out, ref, name):
    assert out.shape == ref.shape, f"{name}: shape mismatch {out.shape} vs {ref.shape}"
    assert jnp.allclose(out, ref, atol=3e-3, rtol=3e-2), f"{name}: mismatch vs JAX reference"


if __name__ == "__main__":
    root = jax.random.PRNGKey(0)
    k_in, k_par1, k_par2 = jax.random.split(root, 3)
    kq, kk, kv = jax.random.split(k_in, 3)

    # --- Test 1: small cross-attention, depth=16 (in-kernel head-slice path) ---
    B, Sq, Sk = 2, 8, 8
    dim1, heads1 = 32, 2
    query = jax.random.normal(kq, (B, Sq, dim1), jnp.float32)
    key = jax.random.normal(kk, (B, Sk, dim1), jnp.float32)
    value = jax.random.normal(kv, (B, Sk, dim1), jnp.float32)

    mod1 = BaseAttentionPallas(dim1, dim1, dim1, heads1, key=k_par1)
    out1 = jax.block_until_ready(mod1(query, key, value))
    _check(out1, reference_forward(mod1, query, key, value), "cross-attn d=16")

    # --- Test 2: self-attention fast path (fused qkv projection) ---
    out2 = jax.block_until_ready(mod1(query, query, query))
    _check(out2, reference_forward(mod1, query, query, query), "self-attn fused qkv")

    # --- Test 3: depth=128 (grid-over-heads attention path) ---
    dim2, heads2 = 256, 2
    query2 = jax.random.normal(kq, (B, Sq, dim2), jnp.float32)
    key2 = jax.random.normal(kk, (B, Sk, dim2), jnp.float32)
    value2 = jax.random.normal(kv, (B, Sk, dim2), jnp.float32)
    mod2 = BaseAttentionPallas(dim2, dim2, dim2, heads2, key=k_par2)
    out3 = jax.block_until_ready(mod2(query2, key2, value2))
    _check(out3, reference_forward(mod2, query2, key2, value2), "cross-attn d=128")

    print("KERNEL_OK")
</pallas_src>

<mosaic_0001>
module attributes {stable_mosaic.version = 11 : i64} {
  func.func @_linear_kernel_single_k(%arg0: i32, %arg1: i32, %arg2: memref<16x32xf32, #tpu.memory_space<vmem>>, %arg3: memref<32x32xbf16, #tpu.memory_space<vmem>>, %arg4: memref<1x32xf32, #tpu.memory_space<vmem>>, %arg5: memref<16x32xbf16, #tpu.memory_space<vmem>>) attributes {dimension_semantics = [#tpu.dimension_semantics<parallel>, #tpu.dimension_semantics<parallel>], iteration_bounds = array<i64: 1, 1>, scalar_prefetch = 0 : i64, scratch_operands = 0 : i64, tpu.core_type = #tpu.core_type<tc>, window_params = [{transform_indices = @transform_0, window_bounds = array<i64: 16, 32>}, {transform_indices = @transform_1, window_bounds = array<i64: 32, 32>}, {transform_indices = @transform_2, window_bounds = array<i64: 1, 32>}, {transform_indices = @transform_3, window_bounds = array<i64: 16, 32>}]} {
    %c0 = arith.constant 0 : index
    %c0_0 = arith.constant 0 : index
    %0 = vector.load %arg2[%c0, %c0_0] : memref<16x32xf32, #tpu.memory_space<vmem>>, vector<16x32xf32>
    %1 = arith.truncf %0 : vector<16x32xf32> to vector<16x32xbf16>
    %c0_1 = arith.constant 0 : index
    %c0_2 = arith.constant 0 : index
    %2 = vector.load %arg3[%c0_1, %c0_2] : memref<32x32xbf16, #tpu.memory_space<vmem>>, vector<32x32xbf16>
    %cst = arith.constant dense<0.000000e+00> : vector<16x32xf32>
    %3 = tpu.matmul %1, %2, %cst {dimension_numbers = #tpu.dot_dimension_numbers<[1], [0], [0], [1], [0, 0, 1, 1], [], []>} : vector<16x32xbf16>, vector<32x32xbf16>, vector<16x32xf32> -> vector<16x32xf32>
    %c0_3 = arith.constant 0 : index
    %c0_4 = arith.constant 0 : index
    %4 = vector.load %arg4[%c0_3, %c0_4] : memref<1x32xf32, #tpu.memory_space<vmem>>, vector<1x32xf32>
    %5 = vector.broadcast %4 : vector<1x32xf32> to vector<16x32xf32>
    %6 = arith.addf %3, %5 : vector<16x32xf32>
    %7 = arith.truncf %6 : vector<16x32xf32> to vector<16x32xbf16>
    %c0_5 = arith.constant 0 : index
    %c0_6 = arith.constant 0 : index
    %8 = vector.load %arg5[%c0_5, %c0_6] : memref<16x32xbf16, #tpu.memory_space<vmem>>, vector<16x32xbf16>
    tpu.vector_store %arg5[%c0_5, %c0_6], %7 {strides = array<i32>} : memref<16x32xbf16, #tpu.memory_space<vmem>>, vector<16x32xbf16>,
    return
  }
  func.func @transform_0(%arg0: i32, %arg1: i32) -> (i32, i32) {
    %c0_i32 = arith.constant 0 : i32
    %c0_i32_0 = arith.constant 0 : i32
    return %arg0, %c0_i32 : i32, i32
  }
  func.func @transform_1(%arg0: i32, %arg1: i32) -> (i32, i32) {
    %c0_i32 = arith.constant 0 : i32
    %c0_i32_0 = arith.constant 0 : i32
    return %c0_i32, %arg1 : i32, i32
  }
  func.func @transform_2(%arg0: i32, %arg1: i32) -> (i32, i32) {
    %c0_i32 = arith.constant 0 : i32
    %c0_i32_0 = arith.constant 0 : i32
    return %c0_i32, %arg1 : i32, i32
  }
  func.func @transform_3(%arg0: i32, %arg1: i32) -> (i32, i32) {
    %c0_i32 = arith.constant 0 : i32
    return %arg0, %arg1 : i32, i32
  }
}

</mosaic_0001>

<llo_original>
// kernel: tpu_custom_call.1
$region0: #{tpu_custom_call.1}
  #allocation0 [shape = 'u32[]', space=smem, size = 0x4, offset = 0x4, fixed_abs, tag = 'smem constant byte address 0x4 - core index']
  #allocation1 [shape = 'u32[144,128]{1,0:T(1,128)}', space=vmem, size = 0x12000, scoped, tag = 'internal scratch']
  %s0 = inlined_call_operand.hbm [shape: f32[16,32], index: 0, kind: input, shape index: {}]
  %s1 = inlined_call_operand.hbm [shape: bf16[32,32], index: 1, kind: input, shape index: {}]
  %s2 = inlined_call_operand.vmem [shape: f32[1,32], index: 2, kind: input, shape index: {}]
  %s3 = inlined_call_operand.hbm [shape: bf16[16,32], index: 3, kind: output, shape index: {}]
  %s4 = sld [smem:[#allocation0]]
  $region30: #{tpu_custom_call.1} parent=0
    _
  %s6 = ssub.s32 1, %s4
  %s7 = scalar_select 0, %s6, %s4
  $region1: #{tpu_custom_call.1} parent=0
    #allocation2 [shape = 'u8[8192]{0}', space=vmem, size = 0x2000, scoped, tag = 'input window, operand 0, single buffered']
    #allocation3 [shape = 's32[1]{0}', space=sflag, size = 0x4, scoped, tag = 'scoped memory for tpu_custom_call.1']
    #allocation4 [shape = 's32[1]{0}', space=sflag, size = 0x4, scoped, tag = 'scoped memory for tpu_custom_call.1']
    #allocation5 [shape = 'u8[8192]{0}', space=vmem, size = 0x2000, scoped, tag = 'input window, operand 1, single buffered']
    #allocation6 [shape = 's32[1]{0}', space=sflag, size = 0x4, scoped, tag = 'scoped memory for tpu_custom_call.1']
    #allocation7 [shape = 'u8[4096]{0}', space=vmem, size = 0x1000, scoped, tag = 'output window, operand 0, single buffered']
    %8 = vsyncpa [#allocation3], 0
    %9 = vsyncpa [#allocation6], 0
    %10 = vsyncpa [#allocation4], 0
    // Predicated region
    $region2: #{tpu_custom_call.1} parent=1 // pred_check
      _
    $region3: #{tpu_custom_call.1} parent=1 // pred_check_branch
      %12 = sbr.rel (0) target = $region5
    $region4: #{tpu_custom_call.1} parent=1 // pred_region
      %s14 = ssub.s32 256, 256
      %15 = vsyncadd [#allocation3], %s14
      %s16 = sshll.u32 [#allocation2], 4
      %s17 = int_to_ptr.vmem [resolvable:$true] %s16
      %22 = dma.hbm_to_vmem [thread:$0]  %s0, 256, %s17, [#allocation3], 128, 128, 8
    $region5: #{tpu_custom_call.1} parent=1 // pred_fallthru
      _
    // Predicated region
    $region6: #{tpu_custom_call.1} parent=1 // pred_check
      _
    $region7: #{tpu_custom_call.1} parent=1 // pred_check_branch
      %24 = sbr.rel (0) target = $region9
    $region8: #{tpu_custom_call.1} parent=1 // pred_region
      %s26 = ssub.s32 256, 256
      %27 = vsyncadd [#allocation6], %s26
      %s28 = sshll.u32 [#allocation5], 4
      %s29 = int_to_ptr.vmem [resolvable:$true] %s28
      %34 = dma.hbm_to_vmem [thread:$0]  %s1, 256, %s29, [#allocation6], 64, 64, 4
    $region9: #{tpu_custom_call.1} parent=1 // pred_fallthru
      _
    // Predicated region
    $region10: #{tpu_custom_call.1} parent=1 // pred_check
      _
    $region11: #{tpu_custom_call.1} parent=1 // pred_check_branch
      %36 = sbr.rel (0) target = $region13
    $region12: #{tpu_custom_call.1} parent=1 // pred_region
      _
    $region13: #{tpu_custom_call.1} parent=1 // pred_fallthru
      _
    // Predicated region
    $region14: #{tpu_custom_call.1} parent=1 // pred_check
      _
    $region15: #{tpu_custom_call.1} parent=1 // pred_check_branch
      %38 = sbr.rel (0) target = $region17
    $region16: #{tpu_custom_call.1} parent=1 // pred_region
      %39 = dma.done [#allocation3], 256
    $region17: #{tpu_custom_call.1} parent=1 // pred_fallthru
      _
    // Predicated region
    $region18: #{tpu_custom_call.1} parent=1 // pred_check
      _
    $region19: #{tpu_custom_call.1} parent=1 // pred_check_branch
      %41 = sbr.rel (0) target = $region21
    $region20: #{tpu_custom_call.1} parent=1 // pred_region
      %42 = dma.done [#allocation6], 256
    $region21: #{tpu_custom_call.1} parent=1 // pred_fallthru
      _
    %v44 = vld [vmem:[#allocation2] sm:$0xff]
    %v45 = vld [vmem:[#allocation2 + $0x8] sm:$0xff]
    %v46 = vpack.c.bf16 %v45, %v44
    %v47 = vld [vmem:[#allocation5] sm:$0xf]
    %v48 = vld [vmem:[#allocation5 + $0x4] sm:$0xf]
    %v49 = vld [vmem:[#allocation5 + $0x8] sm:$0xf]
    %v50 = vld [vmem:[#allocation5 + $0xc] sm:$0xf]
    %v51 = vld [vmem:[%s2] sm:$0x1]
    %v53 = vlaneseq
    %v54 = vshrl.u32 %v53, 7
    %v55 = vsub.s32 0, %v54
    %v56 = vrot.slane %v51, %v55
    %v62 = vunpack.c.l.b16 %v47
    %v63 = vunpack.c.l.b16 %v48
    %v64 = vunpack.c.l.b16 %v49
    %v65 = vunpack.c.l.b16 %v50
    %v66 = vpack.c.b16 %v63, %v62
    %v67 = vpack.c.b16 %v65, %v64
    %vm70 = vcmask 261120
    %v72 = vsel %vm70, %v46, 0
    %74 = vmatprep.subr.bf16.mxu0 0
    %75 = vmatpush1.bf16.msra.mxu0 %v66
    %76 = vmatprep.subr.bf16.mxu0 0
    %77 = vmatpush1.bf16.msra.mxu0 %v67
    %78 = vmatprep.subr.bf16.mxu0 0
    %79 = vmatpush1.bf16.msra.mxu0 0
    %80 = vmatprep.subr.bf16.mxu0 0
    %81 = vmatpush1.bf16.msra.mxu0 0
    %82 = vmatprep.subr.bf16.mxu0 0
    %83 = vmatpush1.bf16.msra.mxu0 0
    %84 = vmatprep.subr.bf16.mxu0 0
    %85 = vmatpush1.bf16.msra.mxu0 0
    %86 = vmatprep.subr.bf16.mxu0 0
    %87 = vmatpush1.bf16.msra.mxu0 0
    %88 = vmatprep.subr.bf16.mxu0 0
    %89 = vmatpush1.bf16.msra.mxu0 0
    %90 = vmatprep.subr.bf16.mxu0 0
    %91 = vmatpush1.bf16.msra.mxu0 0
    %92 = vmatprep.subr.bf16.mxu0 0
    %93 = vmatpush1.bf16.msra.mxu0 0
    %94 = vmatprep.subr.bf16.mxu0 0
    %95 = vmatpush1.bf16.msra.mxu0 0
    %96 = vmatprep.subr.bf16.mxu0 0
    %97 = vmatpush1.bf16.msra.mxu0 0
    %98 = vmatprep.subr.bf16.mxu0 0
    %99 = vmatpush1.bf16.msra.mxu0 0
    %100 = vmatprep.subr.bf16.mxu0 0
    %101 = vmatpush1.bf16.msra.mxu0 0
    %102 = vmatprep.subr.bf16.mxu0 0
    %103 = vmatpush1.bf16.msra.mxu0 0
    %104 = vmatprep.subr.bf16.mxu0 0
    %105 = vmatpush1.bf16.msra.mxu0 0
    %106 = vmatprep.mubr.bf16.mxu0 0
    %107 = vmatmul.mubr.bf16.gmra.mrb[0].mxu0 %v72
    %v108 = vpop.f32.mrb[0].mxu0
    %v109 = vadd.f32 %v56, %v108
    %v110 = vpop.f32.mrb[0].mxu0
    %v111 = vpop.f32.mrb[0].mxu0
    %v112 = vadd.f32 %v56, %v111
    %v113 = vpop.f32.mrb[0].mxu0
    %114 = vdwg.mxu0
    %v115 = vpack.c.bf16 %v112, %v109
    %v117 = vunpack.c.l.b16 %v115
    %v118 = vunpack.c.h.b16 %v115
    %v119 = vpack.c.b16 %v117, %v117
    %v120 = vpack.c.b16 %v118, %v118
    %vm123 = vcmask 257024
    %124 = vst.msk [vmem:[#allocation7] sm:$0xf] %vm123, %v119
    %125 = vst.msk [vmem:[#allocation7 + $0x4] sm:$0xf] %vm123, %v120
    // Predicated region
    $region22: #{tpu_custom_call.1} parent=1 // pred_check
      _
    $region23: #{tpu_custom_call.1} parent=1 // pred_check_branch
      %127 = sbr.rel (0) target = $region25
    $region24: #{tpu_custom_call.1} parent=1 // pred_region
      %s129 = ssub.s32 128, 128
      %130 = vsyncadd [#allocation4], %s129
      %s131 = sshll.u32 [#allocation7], 4
      %s132 = int_to_ptr.vmem [resolvable:$true] %s131
      %137 = dma.vmem_to_hbm [thread:$0]  %s132, 128, %s3, [#allocation4], 64, 64, 4
    $region25: #{tpu_custom_call.1} parent=1 // pred_fallthru
      _
    // Predicated region
    $region26: #{tpu_custom_call.1} parent=1 // pred_check
      _
    $region27: #{tpu_custom_call.1} parent=1 // pred_check_branch
      %139 = sbr.rel (0) target = $region29
    $region28: #{tpu_custom_call.1} parent=1 // pred_region
      %140 = dma.done [#allocation4], 128
    $region29: #{tpu_custom_call.1} parent=1 // pred_fallthru
      _
    %141 = vsyncpa [#allocation3], 1
    %142 = vsyncpa [#allocation6], 1
    %143 = vsyncpa [#allocation4], 1

</llo_original>
